<compile_context>
chip_gen: v7x
topology: tpu7x:2x2x1
jax: 0.10.0
libtpu: 0.0.40
codegen_flags: <defaults>
</compile_context>

<pallas_src>
import math

import jax
import jax.numpy as jnp
from jax import lax
from jax.experimental import pallas as pl
from jax.experimental.pallas import tpu as pltpu


# ----------------------------------------------------------------------------
# Pallas kernel: fused (W @ frames^T) + ReLU for one (m, k-tile) block
# ----------------------------------------------------------------------------

def _encoder_conv_relu_kernel(f_ref, w_ref, o_ref):
    # f_ref : (1, L, Kt)   frame matrix tile (time frames in lanes)
    # w_ref : (N, L)       full conv filter bank (VMEM-resident, fetched once)
    # o_ref : (1, N, Kt)   output tile, PyTorch [M, N, K] layout (lane-dense K)
    y = jnp.dot(w_ref[...], f_ref[0], preferred_element_type=jnp.float32)
    o_ref[0] = jnp.maximum(y, 0.0)


# ----------------------------------------------------------------------------
# Helpers
# ----------------------------------------------------------------------------

def _round_up(x, m):
    return ((x + m - 1) // m) * m


def _frames_T(x, L, stride, K):
    """x: [M, T] -> framesT: [M, L, K] with framesT[m, l, k] = x[m, k*stride + l].

    Fast path uses the 50%-overlap reshape (stride == L//2, L even): no gather,
    only cheap reshapes/slices/one small transpose of a T-sized array.
    """
    M = x.shape[0]
    if L == 2 * stride:
        # chunksT[m, s, k] = x[m, k*stride + s],  shape [M, stride, K+1]
        chunksT = x[:, :(K + 1) * stride].reshape(M, K + 1, stride).transpose(0, 2, 1)
        return jnp.concatenate([chunksT[:, :, :K], chunksT[:, :, 1:K + 1]], axis=1)
    # General (odd L) fallback: L strided slices, stacked (still no 2-D gather).
    cols = [lax.slice(x, (0, l), (M, l + (K - 1) * stride + 1), (1, stride))
            for l in range(L)]
    return jnp.stack(cols, axis=1)


def _pick_k_tile(K, N, L, pref=2048, vmem_budget=24 * 1024 * 1024):
    """Lane-aligned K tile; large (multi-MiB output block) but sized so the
    double-buffered working set stays within a v7x-safe VMEM budget."""
    Kt = min(pref, _round_up(K, 128))
    # double-buffered frames + output blocks + (tiny) weight
    while Kt > 128 and 2 * 4 * Kt * (L + N) + 2 * 4 * N * L > vmem_budget:
        Kt //= 2
    if Kt >= K:
        Kt = K  # single full-extent block (always a legal block shape)
    return Kt


# ----------------------------------------------------------------------------
# Wrapper
# ----------------------------------------------------------------------------

def encoder_forward(mixture, weight, L):
    """Encoder.forward.

    mixture : [M, T]       float32 raw waveform
    weight  : [N, 1, L]    Conv1d weight (or [N, L])
    returns : [M, N, K]    relu(conv1d(mixture)),  K = (T - L) // (L//2) + 1
    """
    if weight.ndim == 3:
        weight = weight[:, 0, :]                       # [N, L]
    weight = weight.astype(jnp.float32)
    mixture = mixture.astype(jnp.float32)

    N = weight.shape[0]
    stride = L // 2
    M, T = mixture.shape
    K = (T - L) // stride + 1

    framesT = _frames_T(mixture, L, stride, K)         # [M, L, K]

    Kt = _pick_k_tile(K, N, L)                         # lane-dense output tile
    k_blocks = pl.cdiv(K, Kt)                          # ragged last block is masked
    grid = (M, k_blocks)

    # Working-set estimate (double-buffered inputs/outputs) + headroom,
    # capped well under v7x's 64 MiB physical VMEM.
    work_bytes = 2 * 4 * Kt * (L + N) + 2 * 4 * N * L
    vmem_limit = min(48 * 1024 * 1024, max(2 * work_bytes, 16 * 1024 * 1024))

    return pl.pallas_call(
        _encoder_conv_relu_kernel,
        out_shape=jax.ShapeDtypeStruct((M, N, K), jnp.float32),
        grid_spec=pltpu.PrefetchScalarGridSpec(
            num_scalar_prefetch=0,
            grid=grid,
            in_specs=[
                pl.BlockSpec((1, L, Kt), lambda m, k: (m, 0, k)),
                # constant index_map: weight block is fetched once and stays resident
                pl.BlockSpec((N, L), lambda m, k: (0, 0)),
            ],
            out_specs=pl.BlockSpec((1, N, Kt), lambda m, k: (m, 0, k)),
        ),
        compiler_params=pltpu.CompilerParams(
            # fully data-parallel grid (contraction dim L lives inside a tile);
            # both axes can be sharded across v7x's two TensorCores.
            dimension_semantics=("parallel", "parallel"),
            vmem_limit_bytes=vmem_limit,
        ),
    )(framesT, weight)


# ----------------------------------------------------------------------------

if __name__ == "__main__":
    # Encoder(L, N): L=16 (stride=8), N=64 filters, batch M=2.
    L, N = 16, 64
    M = 2
    stride = L // 2

    key = jax.random.PRNGKey(0)
    k_x, k_w = jax.random.split(key)
    weight = jax.random.normal(k_w, (N, 1, L), dtype=jnp.float32) / math.sqrt(L)

    def reference(x, w):
        r = lax.conv_general_dilated(
            x[:, None, :], w,
            window_strides=(stride,), padding="VALID",
            dimension_numbers=("NCH", "OIH", "NCH"),
            precision=lax.Precision.HIGHEST)
        return jnp.maximum(r, 0.0)

    fwd = jax.jit(lambda x, w: encoder_forward(x, w, L))

    # Two cases: (a) small lane-aligned K (single block); (b) ragged K > Kt so
    # the cdiv grid + masked last block path is exercised.
    for K_frames in (128, 2500):
        T = L + stride * (K_frames - 1)
        x = jax.random.normal(jax.random.fold_in(k_x, K_frames), (M, T),
                              dtype=jnp.float32)
        out = fwd(x, weight)
        jax.block_until_ready(out)

        assert out.shape == (M, N, K_frames), (out.shape, K_frames)
        assert bool(jnp.all(out >= 0.0))                 # ReLU output

        ref = reference(x, weight)
        max_err = float(jnp.max(jnp.abs(out - ref)))
        assert max_err < 1e-3, (K_frames, max_err)

    print("KERNEL_OK")
</pallas_src>

<mosaic_0001>
module attributes {stable_mosaic.version = 11 : i64} {
  func.func @_encoder_conv_relu_kernel(%arg0: i32, %arg1: i32, %arg2: memref<1x16x128xf32, #tpu.memory_space<vmem>>, %arg3: memref<64x16xf32, #tpu.memory_space<vmem>>, %arg4: memref<1x64x128xf32, #tpu.memory_space<vmem>>) attributes {dimension_semantics = [#tpu.dimension_semantics<parallel>, #tpu.dimension_semantics<parallel>], iteration_bounds = array<i64: 2, 1>, scalar_prefetch = 0 : i64, scratch_operands = 0 : i64, tpu.core_type = #tpu.core_type<tc>, window_params = [{transform_indices = @transform_0, window_bounds = array<i64: 1, 16, 128>}, {pipeline_mode = #tpu.pipeline_mode<synchronous>, transform_indices = @transform_1, window_bounds = array<i64: 64, 16>}, {transform_indices = @transform_2, window_bounds = array<i64: 1, 64, 128>}]} {
    %c0 = arith.constant 0 : index
    %c0_0 = arith.constant 0 : index
    %0 = vector.load %arg3[%c0, %c0_0] : memref<64x16xf32, #tpu.memory_space<vmem>>, vector<64x16xf32>
    %c0_1 = arith.constant 0 : index
    %c0_2 = arith.constant 0 : index
    %c0_3 = arith.constant 0 : index
    %1 = vector.load %arg2[%c0_1, %c0_2, %c0_3] : memref<1x16x128xf32, #tpu.memory_space<vmem>>, vector<1x16x128xf32>
    %2 = vector.shape_cast %1 : vector<1x16x128xf32> to vector<16x128xf32>
    %cst = arith.constant dense<0.000000e+00> : vector<64x128xf32>
    %3 = tpu.matmul %0, %2, %cst {dimension_numbers = #tpu.dot_dimension_numbers<[1], [0], [0], [1], [0, 0, 1, 1], [], []>} : vector<64x16xf32>, vector<16x128xf32>, vector<64x128xf32> -> vector<64x128xf32>
    %cst_4 = arith.constant 0.000000e+00 : f32
    %4 = vector.broadcast %cst_4 : f32 to vector<64x128xf32>
    %5 = arith.maximumf %3, %4 : vector<64x128xf32>
    %c0_5 = arith.constant 0 : index
    %c0_6 = arith.constant 0 : index
    %c0_7 = arith.constant 0 : index
    %6 = vector.load %arg4[%c0_5, %c0_6, %c0_7] : memref<1x64x128xf32, #tpu.memory_space<vmem>>, vector<1x64x128xf32>
    %7 = vector.shape_cast %6 : vector<1x64x128xf32> to vector<64x128xf32>
    %8 = vector.shape_cast %5 : vector<64x128xf32> to vector<1x64x128xf32>
    tpu.vector_store %arg4[%c0_5, %c0_6, %c0_7], %8 {strides = array<i32>} : memref<1x64x128xf32, #tpu.memory_space<vmem>>, vector<1x64x128xf32>,
    return
  }
  func.func @transform_0(%arg0: i32, %arg1: i32) -> (i32, i32, i32) {
    %c0_i32 = arith.constant 0 : i32
    %c0_i32_0 = arith.constant 0 : i32
    return %arg0, %c0_i32, %arg1 : i32, i32, i32
  }
  func.func @transform_1(%arg0: i32, %arg1: i32) -> (i32, i32) {
    %c0_i32 = arith.constant 0 : i32
    %c0_i32_0 = arith.constant 0 : i32
    %c0_i32_1 = arith.constant 0 : i32
    return %c0_i32, %c0_i32_0 : i32, i32
  }
  func.func @transform_2(%arg0: i32, %arg1: i32) -> (i32, i32, i32) {
    %c0_i32 = arith.constant 0 : i32
    %c0_i32_0 = arith.constant 0 : i32
    return %arg0, %c0_i32, %arg1 : i32, i32, i32
  }
}

</mosaic_0001>

<llo_original>
// kernel: _lambda_.1
$region0: #{_lambda_.1}
  #allocation0 [shape = 'u32[]', space=smem, size = 0x4, offset = 0x4, fixed_abs, tag = 'smem constant byte address 0x4 - core index']
  #allocation1 [shape = 'u32[144,128]{1,0:T(1,128)}', space=vmem, size = 0x12000, scoped, tag = 'internal scratch']
  %s0 = inlined_call_operand.vmem [shape: f32[2,16,128], index: 0, kind: input, shape index: {}]
  %s1 = inlined_call_operand.vmem [shape: f32[64,16], index: 1, kind: input, shape index: {}]
  %s2 = inlined_call_operand.hbm [shape: f32[2,64,128], index: 2, kind: output, shape index: {}]
  %s3 = sld [smem:[#allocation0]]
  $region41: #{_lambda_.1} parent=0
    _
  %s5 = ssub.s32 1, %s3
  %s6 = scalar_select 0, %s5, %s3
  $region1: #{_lambda_.1} parent=0
    #allocation2 [shape = 'u8[65536]{0}', space=vmem, size = 0x10000, scoped, tag = 'output window, operand 0']
    #allocation3 [shape = 's32[2]{0}', space=sflag, size = 0x8, scoped, tag = 'scoped memory for _lambda_.1']
    %7 = vsyncpa [#allocation3], 0
    %s8 = scalar_lea.sflag [#allocation3], 1
    %9 = vsyncpa %s8, 0
    loop: start=0, step=1, limit=4
    $region2: #{_lambda_.1} parent=1 // loop_pre_header
      _
    $region3: #{_lambda_.1} parent=1 // loop_header
      %s11 = sphi 0, %s15
      %p12 = scmp.ge.s32.totalorder %s11, 4
      %s18 = sphi 0, %s30
      %s19 = sphi 0, %s26
      %s20 = sphi 0, %s18
      %s21 = sphi 0, %s19
      %s22 = sphi 0, %s20
      %s23 = sphi 0, %s21
      %s35 = sphi 0, %s37
      %s38 = sphi 0, %s35
      %s39 = sphi 0, %s38
      %s55 = sphi 0, %s39
      %s59 = sphi 0, %s59
      %s61 = sphi 0, %s59
      %s62 = sphi 0, %s61
      %s76 = sphi 0, %s62
      %s84 = sphi 0, %s86
      %s87 = sphi 0, %s84
      %s88 = sphi 0, %s87
      %s104 = sphi 0, %s88
    $region4: #{_lambda_.1} parent=1 // loop_header_branch
      %14 = sbr.rel (%p12) target = $region8
    $region5: #{_lambda_.1} parent=1 // loop_body
      %s16 = ssub.s32 %s11, 1
      %s17 = ssub.s32 %s11, 2
      %s24 = sadd.s32 1, %s19
      %p25 = scmp.ge.s32.totalorder %s24, 1
      %s26 = scalar_select %p25, 0, %s24
      %s27 = sadd.s32 1, %s18
      %s28 = scalar_select %p25, %s27, %s18
      %p29 = scmp.ge.s32.totalorder %s28, 2
      %s30 = scalar_select %p29, 0, %s28
      %s31 = ssub.s32 %s18, %s30
      %s32 = ssub.s32 %s19, %s26
      %s33 = sor.u32 %s31, %s32
      %p34 = scmp.eq.s32.totalorder %s33, 0
      %s36 = sadd.s32 %s35, 1
      %s37 = scalar_select %p34, %s35, %s36
      %p40 = pneg %p34
      %p41 = scmp.eq.s32.totalorder %s11, 1
      %p42 = por %p40, %p41
      %p43 = scmp.ne.s32.totalorder %s35, %s38
      %p44 = scmp.eq.s32.totalorder %s11, 0
      %p45 = por %p43, %p44
      %p46 = scmp.ne.s32.totalorder %s35, %s38
      %p47 = scmp.eq.s32.totalorder %s16, 1
      %p48 = por %p46, %p47
      %p49 = scmp.ne.s32.totalorder %s38, %s39
      %p50 = scmp.eq.s32.totalorder %s16, 0
      %p51 = por %p49, %p50
      %p52 = scmp.ne.s32.totalorder %s38, %s39
      %p53 = scmp.eq.s32.totalorder %s17, 1
      %p54 = por %p52, %p53
      %p56 = scmp.ne.s32.totalorder %s39, %s55
      %p57 = scmp.eq.s32.totalorder %s17, 0
      %p58 = por %p56, %p57
      %s60 = sadd.s32 %s59, 1
      %p63 = scmp.eq.s32.totalorder %s11, 1
      %p64 = scmp.ne.s32.totalorder %s59, %s61
      %p65 = scmp.eq.s32.totalorder %s11, 0
      %p66 = por %p64, %p65
      %p67 = scmp.ne.s32.totalorder %s59, %s61
      %p68 = scmp.eq.s32.totalorder %s16, 1
      %p69 = por %p67, %p68
      %p70 = scmp.ne.s32.totalorder %s61, %s62
      %p71 = scmp.eq.s32.totalorder %s16, 0
      %p72 = por %p70, %p71
      %p73 = scmp.ne.s32.totalorder %s61, %s62
      %p74 = scmp.eq.s32.totalorder %s17, 1
      %p75 = por %p73, %p74
      %p77 = scmp.ne.s32.totalorder %s62, %s76
      %p78 = scmp.eq.s32.totalorder %s17, 0
      %p79 = por %p77, %p78
      %s80 = ssub.s32 %s18, %s30
      %s81 = ssub.s32 %s19, %s26
      %s82 = sor.u32 %s80, %s81
      %p83 = scmp.eq.s32.totalorder %s82, 0
      %s85 = sadd.s32 %s84, 1
      %s86 = scalar_select %p83, %s84, %s85
      %p89 = pneg %p83
      %p90 = scmp.eq.s32.totalorder %s11, 1
      %p91 = por %p89, %p90
      %p92 = scmp.ne.s32.totalorder %s84, %s87
      %p93 = scmp.eq.s32.totalorder %s11, 0
      %p94 = por %p92, %p93
      %p95 = scmp.ne.s32.totalorder %s84, %s87
      %p96 = scmp.eq.s32.totalorder %s16, 1
      %p97 = por %p95, %p96
      %p98 = scmp.ne.s32.totalorder %s87, %s88
      %p99 = scmp.eq.s32.totalorder %s16, 0
      %p100 = por %p98, %p99
      %p101 = scmp.ne.s32.totalorder %s87, %s88
      %p102 = scmp.eq.s32.totalorder %s17, 1
      %p103 = por %p101, %p102
      %p105 = scmp.ne.s32.totalorder %s88, %s104
      %p106 = scmp.eq.s32.totalorder %s17, 0
      %p107 = por %p105, %p106
      %p108 = scmp.le.s32.totalorder 1, %s11
      %p109 = scmp.lt.s32.totalorder %s11, 3
      %p110 = pnand %p108, %p109
      %p111 = pneg %p110
      // Predicated region
      $region9: #{_lambda_.1} parent=5 // pred_check
        _
      $region10: #{_lambda_.1} parent=5 // pred_check_branch
        %113 = sbr.rel (%p110) target = $region12
      $region11: #{_lambda_.1} parent=5 // pred_region
        %s114 = ssub.s32 %s11, 1
        // Predicated region
        $region13: #{_lambda_.1} parent=11 // pred_check
          %p115 = pneg %p72
        $region14: #{_lambda_.1} parent=11 // pred_check_branch
          %117 = sbr.rel (%p115) target = $region16
        $region15: #{_lambda_.1} parent=11 // pred_region
          _
        $region16: #{_lambda_.1} parent=11 // pred_fallthru
          _
      $region12: #{_lambda_.1} parent=5 // pred_fallthru
        _
      %p118 = scmp.lt.s32.totalorder %s11, 2
      // Predicated region
      $region17: #{_lambda_.1} parent=5 // pred_check
        %p119 = pneg %p118
      $region18: #{_lambda_.1} parent=5 // pred_check_branch
        %121 = sbr.rel (%p119) target = $region20
      $region19: #{_lambda_.1} parent=5 // pred_region
        // Predicated region
        $region21: #{_lambda_.1} parent=19 // pred_check
          %p122 = pneg %p45
        $region22: #{_lambda_.1} parent=19 // pred_check_branch
          %124 = sbr.rel (%p122) target = $region24
        $region23: #{_lambda_.1} parent=19 // pred_region
          %p125 = scmp.lt.s32.totalorder %s18, 1
          %s126 = scalar_select %p125, %s18, 1
          %p127 = scmp.lt.s32.totalorder %s19, 0
          %s128 = scalar_select %p127, %s19, 0
          %s129 = smul.addr %s126, 2
          %s130 = sadd.s32 %s128, %s129
          %s131 = smul.addr %s130, 8
          %s132 = scalar_lea.vmem %s0, %s131
        $region24: #{_lambda_.1} parent=19 // pred_fallthru
          _
      $region20: #{_lambda_.1} parent=5 // pred_fallthru
        _
      %p133 = scmp.le.s32.totalorder 1, %s11
      %p134 = scmp.lt.s32.totalorder %s11, 3
      %p135 = pnand %p133, %p134
      %p136 = pneg %p135
      // Predicated region
      $region25: #{_lambda_.1} parent=5 // pred_check
        _
      $region26: #{_lambda_.1} parent=5 // pred_check_branch
        %138 = sbr.rel (%p135) target = $region28
      $region27: #{_lambda_.1} parent=5 // pred_region
        %s139 = ssub.s32 %s11, 1
        %p140 = scmp.lt.s32.totalorder %s20, 1
        %s141 = scalar_select %p140, %s20, 1
        %p142 = scmp.lt.s32.totalorder %s21, 0
        %s143 = scalar_select %p142, %s21, 0
        %s144 = smul.addr %s141, 2
        %s145 = sadd.s32 %s143, %s144
        %s146 = smul.addr %s145, 8
        %s147 = scalar_lea.vmem %s0, %s146
        %p148 = pneg %p51
        %p149 = pneg %p48
        %p150 = pneg %p72
        %p151 = pneg %p69
        %p152 = pneg %p100
        %p153 = pneg %p97
        %s154 = sand.u32 %s87, 1
        %s155 = scalar_lea.sflag [#allocation3], %s154
        %s156 = sand.u32 %s87, 1
        %s157 = smul.addr %s156, 64
        %s158 = scalar_lea.vmem [#allocation2], %s157
        %p159 = scmp.lt.s32.totalorder %s20, 1
        %s160 = scalar_select %p159, %s20, 1
        %p161 = scmp.lt.s32.totalorder %s21, 0
        %s162 = scalar_select %p161, %s21, 0
        %s163 = smul.addr %s160, 2
        %s164 = sadd.s32 %s162, %s163
        %s165 = smul.addr %s164, 8
        %s166 = scalar_lea.vmem %s0, %s165
        %v167 = vld [vmem:[%s1] sm:$0xff]
        %v168 = vld [vmem:[%s1 + $0x8] sm:$0xff]
        %v169 = vld [vmem:[%s1 + $0x10] sm:$0xff]
        %v170 = vld [vmem:[%s1 + $0x18] sm:$0xff]
        %v171 = vld [vmem:[%s1 + $0x20] sm:$0xff]
        %v172 = vld [vmem:[%s1 + $0x28] sm:$0xff]
        %v173 = vld [vmem:[%s1 + $0x30] sm:$0xff]
        %v174 = vld [vmem:[%s1 + $0x38] sm:$0xff]
        %v175 = vld [vmem:[%s166] sm:$0xff]
        %v176 = vld [vmem:[%s166 + $0x8] sm:$0xff]
        %vm177 = vcmask 130048
        %v179 = vsel %vm177, %v167, 0
        %v182 = vsel %vm177, %v168, 0
        %v185 = vsel %vm177, %v169, 0
        %v188 = vsel %vm177, %v170, 0
        %v191 = vsel %vm177, %v171, 0
        %v194 = vsel %vm177, %v172, 0
        %v197 = vsel %vm177, %v173, 0
        %v200 = vsel %vm177, %v174, 0
        %202 = vmatprep.subr.mxu0 0.0
        %203 = vmatpush1.msra.mxu0 %v175
        %204 = vmatprep.subr.mxu0 0.0
        %205 = vmatpush1.msra.mxu0 %v176
        %206 = vmatprep.subr.mxu0 0.0
        %207 = vmatpush1.msra.mxu0 0.0
        %208 = vmatprep.subr.mxu0 0.0
        %209 = vmatpush1.msra.mxu0 0.0
        %210 = vmatprep.subr.mxu0 0.0
        %211 = vmatpush1.msra.mxu0 0.0
        %212 = vmatprep.subr.mxu0 0.0
        %213 = vmatpush1.msra.mxu0 0.0
        %214 = vmatprep.subr.mxu0 0.0
        %215 = vmatpush1.msra.mxu0 0.0
        %216 = vmatprep.subr.mxu0 0.0
        %217 = vmatpush1.msra.mxu0 0.0
        %218 = vmatprep.subr.mxu0 0.0
        %219 = vmatpush1.msra.mxu0 0.0
        %220 = vmatprep.subr.mxu0 0.0
        %221 = vmatpush1.msra.mxu0 0.0
        %222 = vmatprep.subr.mxu0 0.0
        %223 = vmatpush1.msra.mxu0 0.0
        %224 = vmatprep.subr.mxu0 0.0
        %225 = vmatpush1.msra.mxu0 0.0
        %226 = vmatprep.subr.mxu0 0.0
        %227 = vmatpush1.msra.mxu0 0.0
        %228 = vmatprep.subr.mxu0 0.0
        %229 = vmatpush1.msra.mxu0 0.0
        %230 = vmatprep.subr.mxu0 0.0
        %231 = vmatpush1.msra.mxu0 0.0
        %232 = vmatprep.subr.mxu0 0.0
        %233 = vmatpush1.msra.mxu0 0.0
        %234 = vmatprep.subr.mxu0 0.0
        %235 = vmatpush1.msra.mxu0 0.0
        %236 = vmatprep.subr.mxu0 0.0
        %237 = vmatpush1.msra.mxu0 0.0
        %238 = vmatprep.subr.mxu0 0.0
        %239 = vmatpush1.msra.mxu0 0.0
        %240 = vmatprep.subr.mxu0 0.0
        %241 = vmatpush1.msra.mxu0 0.0
        %242 = vmatprep.subr.mxu0 0.0
        %243 = vmatpush1.msra.mxu0 0.0
        %244 = vmatprep.subr.mxu0 0.0
        %245 = vmatpush1.msra.mxu0 0.0
        %246 = vmatprep.subr.mxu0 0.0
        %247 = vmatpush1.msra.mxu0 0.0
        %248 = vmatprep.subr.mxu0 0.0
        %249 = vmatpush1.msra.mxu0 0.0
        %250 = vmatprep.subr.mxu0 0.0
        %251 = vmatpush1.msra.mxu0 0.0
        %252 = vmatprep.subr.mxu0 0.0
        %253 = vmatpush1.msra.mxu0 0.0
        %254 = vmatprep.subr.mxu0 0.0
        %255 = vmatpush1.msra.mxu0 0.0
        %256 = vmatprep.subr.mxu0 0.0
        %257 = vmatpush1.msra.mxu0 0.0
        %258 = vmatprep.subr.mxu0 0.0
        %259 = vmatpush1.msra.mxu0 0.0
        %260 = vmatprep.subr.mxu0 0.0
        %261 = vmatpush1.msra.mxu0 0.0
        %262 = vmatprep.subr.mxu0 0.0
        %263 = vmatpush1.msra.mxu0 0.0
        %264 = vmatprep.subr.mxu0 0.0
        %265 = vmatpush1.msra.mxu0 0.0
        %266 = vmatprep.mubr.f32.mxu0 0.0
        %267 = vmatmul.mubr.f32.gmra.mrb[0].mxu0 %v179
        %v268 = vpop.f32.mrb[0].mxu0
        %v269 = vadd.f32 0.0, %v268
        %v270 = vpop.f32.mrb[0].mxu0
        %271 = vmatprep.mubr.f32.mxu0 0.0
        %272 = vmatmul.mubr.f32.gmra.mrb[0].mxu0 %v182
        %v273 = vpop.f32.mrb[0].mxu0
        %v274 = vadd.f32 0.0, %v273
        %v275 = vpop.f32.mrb[0].mxu0
        %276 = vmatprep.mubr.f32.mxu0 0.0
        %277 = vmatmul.mubr.f32.gmra.mrb[0].mxu0 %v185
        %v278 = vpop.f32.mrb[0].mxu0
        %v279 = vadd.f32 0.0, %v278
        %v280 = vpop.f32.mrb[0].mxu0
        %281 = vmatprep.mubr.f32.mxu0 0.0
        %282 = vmatmul.mubr.f32.gmra.mrb[0].mxu0 %v188
        %v283 = vpop.f32.mrb[0].mxu0
        %v284 = vadd.f32 0.0, %v283
        %v285 = vpop.f32.mrb[0].mxu0
        %286 = vmatprep.mubr.f32.mxu0 0.0
        %287 = vmatmul.mubr.f32.gmra.mrb[0].mxu0 %v191
        %v288 = vpop.f32.mrb[0].mxu0
        %v289 = vadd.f32 0.0, %v288
        %v290 = vpop.f32.mrb[0].mxu0
        %291 = vmatprep.mubr.f32.mxu0 0.0
        %292 = vmatmul.mubr.f32.gmra.mrb[0].mxu0 %v194
        %v293 = vpop.f32.mrb[0].mxu0
        %v294 = vadd.f32 0.0, %v293
        %v295 = vpop.f32.mrb[0].mxu0
        %296 = vmatprep.mubr.f32.mxu0 0.0
        %297 = vmatmul.mubr.f32.gmra.mrb[0].mxu0 %v197
        %v298 = vpop.f32.mrb[0].mxu0
        %v299 = vadd.f32 0.0, %v298
        %v300 = vpop.f32.mrb[0].mxu0
        %301 = vmatprep.mubr.f32.mxu0 0.0
        %302 = vmatmul.mubr.f32.gmra.mrb[0].mxu0 %v200
        %v303 = vpop.f32.mrb[0].mxu0
        %v304 = vadd.f32 0.0, %v303
        %v305 = vpop.f32.mrb[0].mxu0
        %306 = vdwg.mxu0
        %v307 = vmax.f32 %v269, 0.0
        %v308 = vmax.f32 %v274, 0.0
        %v309 = vmax.f32 %v279, 0.0
        %v310 = vmax.f32 %v284, 0.0
        %v311 = vmax.f32 %v289, 0.0
        %v312 = vmax.f32 %v294, 0.0
        %v313 = vmax.f32 %v299, 0.0
        %v314 = vmax.f32 %v304, 0.0
        %315 = vst [vmem:[%s158] sm:$0xff] %v307
        %316 = vst [vmem:[%s158 + $0x8] sm:$0xff] %v308
        %317 = vst [vmem:[%s158 + $0x10] sm:$0xff] %v309
        %318 = vst [vmem:[%s158 + $0x18] sm:$0xff] %v310
        %319 = vst [vmem:[%s158 + $0x20] sm:$0xff] %v311
        %320 = vst [vmem:[%s158 + $0x28] sm:$0xff] %v312
        %321 = vst [vmem:[%s158 + $0x30] sm:$0xff] %v313
        %322 = vst [vmem:[%s158 + $0x38] sm:$0xff] %v314
        %s323 = sand.u32 %s87, 1
        %s324 = scalar_lea.sflag [#allocation3], %s323
        %s325 = sand.u32 %s87, 1
        %s326 = smul.addr %s325, 64
        %s327 = scalar_lea.vmem [#allocation2], %s326
        // Predicated region
        $region29: #{_lambda_.1} parent=27 // pred_check
          %p328 = pneg %p97
        $region30: #{_lambda_.1} parent=27 // pred_check_branch
          %330 = sbr.rel (%p328) target = $region32
        $region31: #{_lambda_.1} parent=27 // pred_region
          %s332 = ssub.s32 1024, 1024
          %333 = vsyncadd %s324, %s332
          %s334 = smul.addr %s20, 8
          %s335 = sadd.s32 %s21, %s334
          %s336 = smul.addr %s335, 128
          %s337 = scalar_lea.hbm %s2, %s336
          %s338 = sshll.u32 %s327, 4
          %s339 = int_to_ptr.vmem [resolvable:$true] %s338
          %344 = dma.vmem_to_hbm [thread:$0]  %s339, 1024, %s337, %s324, 128, 128, 8
        $region32: #{_lambda_.1} parent=27 // pred_fallthru
          _
      $region28: #{_lambda_.1} parent=5 // pred_fallthru
        _
      %p345 = scmp.le.s32.totalorder 2, %s11
      // Predicated region
      $region33: #{_lambda_.1} parent=5 // pred_check
        %p346 = pneg %p345
      $region34: #{_lambda_.1} parent=5 // pred_check_branch
        %348 = sbr.rel (%p346) target = $region36
      $region35: #{_lambda_.1} parent=5 // pred_region
        %s349 = ssub.s32 %s11, 2
        // Predicated region
        $region37: #{_lambda_.1} parent=35 // pred_check
          %p350 = pneg %p103
        $region38: #{_lambda_.1} parent=35 // pred_check_branch
          %352 = sbr.rel (%p350) target = $region40
        $region39: #{_lambda_.1} parent=35 // pred_region
          %s353 = sand.u32 %s88, 1
          %s354 = scalar_lea.sflag [#allocation3], %s353
          %s355 = sand.u32 %s88, 1
          %s356 = smul.addr %s355, 64
          %s357 = scalar_lea.vmem [#allocation2], %s356
          %358 = dma.done %s354, 1024
        $region40: #{_lambda_.1} parent=35 // pred_fallthru
          _
      $region36: #{_lambda_.1} parent=5 // pred_fallthru
        _
    $region6: #{_lambda_.1} parent=1 // loop_footer
      %s15 = sadd.s32 1, %s11
    $region7: #{_lambda_.1} parent=1 // loop_footer_branch
      %10 = sbr.rel target = $region3
    $region8: #{_lambda_.1} parent=1 // loop_exit
      _
    %359 = vsyncpa [#allocation3], 1
    %s360 = scalar_lea.sflag [#allocation3], 1
    %361 = vsyncpa %s360, 1

</llo_original>
